<compile_context>
chip_gen: v7x
topology: tpu7x:2x2x1
jax: 0.10.0
libtpu: 0.0.40
codegen_flags: <defaults>
</compile_context>

<pallas_src>
import jax
import jax.numpy as jnp
from jax import lax
from jax.experimental import pallas as pl
from jax.experimental.pallas import tpu as pltpu

POOL = 64  # 8 * patch_size (module default patch_size=8) -> 64x64 ones kernel, stride 64


def _lcm_loss_kernel(est_ref, pw_ref, gt_ref, out_ref):
    t = pl.program_id(2)

    @pl.when(t == 0)
    def _init():
        out_ref[...] = jnp.zeros_like(out_ref)

    _, TH, W = gt_ref.shape
    THp = TH // POOL

    # Row pooling on the VPU: sum each group of 64 consecutive rows.
    # (TH, W) -> (THp, 64, W) is a free leading-dim split (minor dims stay tile-aligned);
    # the reduce runs over the sublane dim and hides under the gt DMA.
    gt = gt_ref[0].reshape(THp, POOL, W).astype(jnp.float32)
    row_pooled = jnp.sum(gt, axis=1)                               # (THp, W)

    # Column pooling: one small MXU matmul against the precomputed 0/1 indicator
    # (== the module's ones(1,1,64,64) conv weight, factored).  Tiny FLOP volume.
    pooled = jnp.dot(row_pooled, pw_ref[...],
                     preferred_element_type=jnp.float32,
                     precision=lax.Precision.HIGHEST)              # (THp, Wp)

    est = est_ref[0, 0, 0].astype(jnp.float32)                     # (THp, Wp)
    out_ref[...] += jnp.sum(jnp.abs(est - pooled))


def _round_up(x, m):
    return (x + m - 1) // m * m


def _vmem_capacity_bytes():
    try:
        cap = getattr(pltpu.get_tpu_info(), "vmem_capacity_bytes", None)
        if cap:
            return int(cap)
    except Exception:
        pass
    return 64 << 20  # conservative (v7x-sized) fallback


def _pick_row_tile(H, row_bytes, max_tile_bytes, hard_cap_bytes):
    """Rows per band: a multiple of 64 dividing H, as large as the soft budget allows.
    If H/64 only has awkward divisors (band would collapse to <25% of budget), take the
    smallest divisor above the budget (often the whole H) when it fits the hard cap."""
    Hp = H // POOL
    group_bytes = POOL * row_bytes
    max_groups = max(1, max_tile_bytes // group_bytes)
    if Hp <= max_groups:
        return H
    best = 1
    for d in range(1, max_groups + 1):
        if Hp % d == 0:
            best = d
    if best * group_bytes * 4 <= max_tile_bytes:       # divisor cliff
        for d in range(max_groups + 1, Hp + 1):
            if Hp % d == 0:
                if d * group_bytes <= hard_cap_bytes:
                    return d * POOL
                break
        # TODO(synk): truly huge H with prime H/64 would need a ragged last band + masking.
    return best * POOL


def lcm_loss(est_map, gt_map, *, max_tile_bytes=None):
    B, H, W = gt_map.shape
    # PyTorch conv2d with stride 64 floors non-multiple sizes; we require exact multiples
    # (otherwise est_map's flattened N would not match the module's output anyway).
    assert H % POOL == 0 and W % POOL == 0
    Hp, Wp = H // POOL, W // POOL
    N = Hp * Wp
    assert est_map.shape == (B, 1, N)

    vmem_cap = _vmem_capacity_bytes()
    if max_tile_bytes is None:
        # Larger bands on v5e/v6e (128 MiB VMEM); slightly smaller on v7x (64 MiB).
        max_tile_bytes = (14 << 20) if vmem_cap >= (96 << 20) else (10 << 20)
    hard_cap = max(max_tile_bytes, vmem_cap // 3 - (4 << 20))

    gt_bytes = jnp.dtype(gt_map.dtype).itemsize
    est_bytes = jnp.dtype(est_map.dtype).itemsize
    TH = _pick_row_tile(H, W * gt_bytes, max_tile_bytes, hard_cap)
    THp = TH // POOL
    nT = H // TH

    # Extra parallel axis so single-batch calls still use both v7x TensorCores.
    S = 2 if (B == 1 and nT >= 2 and nT % 2 == 0) else 1
    nTs = nT // S

    # Row-major reshape keeps est's flattened ordering aligned with the gt row bands.
    est5 = est_map.reshape(B, S, nTs, THp, Wp)

    # 0/1 column-pooling indicator, built once per call and DMA'd once (constant index map).
    pw = (lax.broadcasted_iota(jnp.int32, (W, Wp), 0) // POOL ==
          lax.broadcasted_iota(jnp.int32, (W, Wp), 1)).astype(jnp.float32)

    # VMEM budget: double-buffered native-dtype gt band + one f32 band-sized temp dominate.
    Wpad = _round_up(W, 128)
    vmem_need = (
        2 * TH * Wpad * gt_bytes                                    # gt band x2 buffers
        + TH * Wpad * 4                                             # f32 cast temp / slack
        + 2 * _round_up(THp, 8) * Wpad * 4                          # row_pooled + staging
        + 2 * _round_up(W, 8) * _round_up(Wp, 128) * 4              # pw indicator x2
        + 2 * _round_up(THp, 8) * _round_up(Wp, 128) * est_bytes    # est block x2
    )
    vmem_limit = int(min(max(vmem_need + (8 << 20), 32 << 20), vmem_cap - (6 << 20)))

    partials = pl.pallas_call(
        _lcm_loss_kernel,
        out_shape=jax.ShapeDtypeStruct((B, S, 1, 1), jnp.float32),
        grid_spec=pltpu.PrefetchScalarGridSpec(
            num_scalar_prefetch=0,
            grid=(B, S, nTs),                                       # batch/split parallel, bands reduce
            in_specs=[
                pl.BlockSpec((1, 1, 1, THp, Wp), lambda b, s, t: (b, s, t, 0, 0)),  # est patches
                pl.BlockSpec((W, Wp), lambda b, s, t: (0, 0)),                      # pooling indicator
                pl.BlockSpec((1, TH, W), lambda b, s, t: (b, s * nTs + t, 0)),      # gt row band
            ],
            out_specs=pl.BlockSpec((1, 1, 1, 1), lambda b, s, t: (b, s, 0, 0)),     # partial sums
        ),
        compiler_params=pltpu.CompilerParams(
            dimension_semantics=("parallel", "parallel", "arbitrary"),
            vmem_limit_bytes=vmem_limit,
        ),
    )(est5, pw, gt_map)

    # L1Loss(reduction='mean') over est_map's B*1*N elements; tiny final reduce in JAX.
    return jnp.sum(partials) / jnp.float32(B * N)


def lcm_loss_ref(est_map, gt_map):
    # Pure-JAX reference of the PyTorch forward (f32 accumulation).
    B, H, W = gt_map.shape
    Hp, Wp = H // POOL, W // POOL
    gt = gt_map.astype(jnp.float32)
    gt_lcm = gt.reshape(B, Hp, POOL, Wp, POOL).sum(axis=(2, 4)).reshape(B, 1, -1)
    return jnp.mean(jnp.abs(est_map.astype(jnp.float32) - gt_lcm))


if __name__ == "__main__":
    key = jax.random.PRNGKey(0)
    k1, k2, k3, k4, k5, k6 = jax.random.split(key, 6)

    # Test 1: small map, single row band per batch element, default band sizing.
    B, H, W = 2, 128, 128
    N = (H // POOL) * (W // POOL)
    gt_map = jax.random.uniform(k1, (B, H, W), dtype=jnp.float32)
    est_map = jax.random.uniform(k2, (B, 1, N), dtype=jnp.float32) * (POOL * POOL * 0.5)
    loss = jax.block_until_ready(lcm_loss(est_map, gt_map))
    ref = lcm_loss_ref(est_map, gt_map)
    assert jnp.allclose(loss, ref, rtol=1e-4, atol=1e-3), (loss, ref)

    # Test 2: non-square map with forced small row bands (multi-band reduction path).
    B2, H2, W2 = 2, 256, 192
    N2 = (H2 // POOL) * (W2 // POOL)
    gt2 = jax.random.uniform(k3, (B2, H2, W2), dtype=jnp.float32)
    est2 = jax.random.uniform(k4, (B2, 1, N2), dtype=jnp.float32) * (POOL * POOL * 0.5)
    loss2 = jax.block_until_ready(lcm_loss(est2, gt2, max_tile_bytes=POOL * W2 * 4))
    ref2 = lcm_loss_ref(est2, gt2)
    assert jnp.allclose(loss2, ref2, rtol=1e-4, atol=1e-3), (loss2, ref2)

    # Test 3: batch=1 with bf16 gt -> exercises native-dtype streaming and the extra
    # parallel band-split axis (S=2).
    B3, H3, W3 = 1, 256, 128
    N3 = (H3 // POOL) * (W3 // POOL)
    gt3 = jax.random.uniform(k5, (B3, H3, W3), dtype=jnp.float32).astype(jnp.bfloat16)
    est3 = jax.random.uniform(k6, (B3, 1, N3), dtype=jnp.float32) * (POOL * POOL * 0.5)
    loss3 = jax.block_until_ready(lcm_loss(est3, gt3, max_tile_bytes=POOL * W3 * 4))
    ref3 = lcm_loss_ref(est3, gt3)
    assert jnp.allclose(loss3, ref3, rtol=1e-4, atol=1e-3), (loss3, ref3)

    print("KERNEL_OK")
</pallas_src>

<mosaic_0001>
module attributes {stable_mosaic.version = 11 : i64} {
  func.func @_lcm_loss_kernel(%arg0: i32, %arg1: i32, %arg2: i32, %arg3: memref<1x1x1x2x2xf32, #tpu.memory_space<vmem>>, %arg4: memref<128x2xf32, #tpu.memory_space<vmem>>, %arg5: memref<1x128x128xf32, #tpu.memory_space<vmem>>, %arg6: memref<1x1x1x1xf32, #tpu.memory_space<vmem>>) attributes {dimension_semantics = [#tpu.dimension_semantics<parallel>, #tpu.dimension_semantics<parallel>, #tpu.dimension_semantics<arbitrary>], iteration_bounds = array<i64: 2, 1, 1>, scalar_prefetch = 0 : i64, scratch_operands = 0 : i64, tpu.core_type = #tpu.core_type<tc>, window_params = [{transform_indices = @transform_0, window_bounds = array<i64: 1, 1, 1, 2, 2>}, {pipeline_mode = #tpu.pipeline_mode<synchronous>, transform_indices = @transform_1, window_bounds = array<i64: 128, 2>}, {transform_indices = @transform_2, window_bounds = array<i64: 1, 128, 128>}, {transform_indices = @transform_3, window_bounds = array<i64: 1, 1, 1, 1>}]} {
    %c0_i32 = arith.constant 0 : i32
    %0 = arith.cmpi eq, %arg2, %c0_i32 : i32
    %1 = arith.extui %0 : i1 to i32
    %c0_i32_0 = arith.constant 0 : i32
    %2 = arith.cmpi ne, %1, %c0_i32_0 : i32
    scf.if %2 {
      %cst_20 = arith.constant 0.000000e+00 : f32
      %21 = vector.broadcast %cst_20 : f32 to vector<1x1x1x1xf32>
      %c0_21 = arith.constant 0 : index
      %c0_22 = arith.constant 0 : index
      %c0_23 = arith.constant 0 : index
      %c0_24 = arith.constant 0 : index
      %22 = vector.load %arg6[%c0_21, %c0_22, %c0_23, %c0_24] : memref<1x1x1x1xf32, #tpu.memory_space<vmem>>, vector<1x1x1x1xf32>
      tpu.vector_store %arg6[%c0_21, %c0_22, %c0_23, %c0_24], %21 {strides = array<i32>} : memref<1x1x1x1xf32, #tpu.memory_space<vmem>>, vector<1x1x1x1xf32>,
    } else {
    }
    %c0 = arith.constant 0 : index
    %c0_1 = arith.constant 0 : index
    %c0_2 = arith.constant 0 : index
    %3 = vector.load %arg5[%c0, %c0_1, %c0_2] : memref<1x128x128xf32, #tpu.memory_space<vmem>>, vector<1x128x128xf32>
    %4 = vector.shape_cast %3 : vector<1x128x128xf32> to vector<128x128xf32>
    %5 = vector.shape_cast %4 : vector<128x128xf32> to vector<2x64x128xf32>
    %cst = arith.constant dense<0.000000e+00> : vector<2x128xf32>
    %6 = vector.multi_reduction <add>, %5, %cst [1] : vector<2x64x128xf32> to vector<2x128xf32>
    %c0_3 = arith.constant 0 : index
    %c0_4 = arith.constant 0 : index
    %7 = vector.load %arg4[%c0_3, %c0_4] : memref<128x2xf32, #tpu.memory_space<vmem>>, vector<128x2xf32>
    %cst_5 = arith.constant dense<0.000000e+00> : vector<2x2xf32>
    %8 = tpu.matmul %6, %7, %cst_5 {dimension_numbers = #tpu.dot_dimension_numbers<[1], [0], [0], [1], [0, 0, 1, 1], [], []>, precision = #tpu.contract_precision<fp32>} : vector<2x128xf32>, vector<128x2xf32>, vector<2x2xf32> -> vector<2x2xf32>
    %c0_6 = arith.constant 0 : index
    %c0_7 = arith.constant 0 : index
    %c0_8 = arith.constant 0 : index
    %c0_9 = arith.constant 0 : index
    %c0_10 = arith.constant 0 : index
    %9 = vector.load %arg3[%c0_6, %c0_7, %c0_8, %c0_9, %c0_10] : memref<1x1x1x2x2xf32, #tpu.memory_space<vmem>>, vector<1x1x1x2x2xf32>
    %10 = vector.shape_cast %9 : vector<1x1x1x2x2xf32> to vector<2x2xf32>
    %c0_11 = arith.constant 0 : index
    %c0_12 = arith.constant 0 : index
    %c0_13 = arith.constant 0 : index
    %c0_14 = arith.constant 0 : index
    %11 = vector.load %arg6[%c0_11, %c0_12, %c0_13, %c0_14] : memref<1x1x1x1xf32, #tpu.memory_space<vmem>>, vector<1x1x1x1xf32>
    %12 = arith.subf %10, %8 : vector<2x2xf32>
    %13 = math.absf %12 : vector<2x2xf32>
    %14 = vector.shape_cast %13 : vector<2x2xf32> to vector<1x2x2xf32>
    %cst_15 = arith.constant dense<0.000000e+00> : vector<1xf32>
    %15 = vector.multi_reduction <add>, %14, %cst_15 [1, 2] : vector<1x2x2xf32> to vector<1xf32>
    %16 = vector.shape_cast %15 : vector<1xf32> to vector<1x1x1xf32>
    %17 = vector.extract %16[0, 0, 0] : f32 from vector<1x1x1xf32>
    %18 = vector.broadcast %17 : f32 to vector<1x1x1x1xf32>
    %19 = arith.addf %11, %18 : vector<1x1x1x1xf32>
    %c0_16 = arith.constant 0 : index
    %c0_17 = arith.constant 0 : index
    %c0_18 = arith.constant 0 : index
    %c0_19 = arith.constant 0 : index
    %20 = vector.load %arg6[%c0_16, %c0_17, %c0_18, %c0_19] : memref<1x1x1x1xf32, #tpu.memory_space<vmem>>, vector<1x1x1x1xf32>
    tpu.vector_store %arg6[%c0_16, %c0_17, %c0_18, %c0_19], %19 {strides = array<i32>} : memref<1x1x1x1xf32, #tpu.memory_space<vmem>>, vector<1x1x1x1xf32>,
    return
  }
  func.func @transform_0(%arg0: i32, %arg1: i32, %arg2: i32) -> (i32, i32, i32, i32, i32) {
    %c0_i32 = arith.constant 0 : i32
    %c0_i32_0 = arith.constant 0 : i32
    %c0_i32_1 = arith.constant 0 : i32
    return %arg0, %arg1, %arg2, %c0_i32, %c0_i32_0 : i32, i32, i32, i32, i32
  }
  func.func @transform_1(%arg0: i32, %arg1: i32, %arg2: i32) -> (i32, i32) {
    %c0_i32 = arith.constant 0 : i32
    %c0_i32_0 = arith.constant 0 : i32
    %c0_i32_1 = arith.constant 0 : i32
    return %c0_i32, %c0_i32_0 : i32, i32
  }
  func.func @transform_2(%arg0: i32, %arg1: i32, %arg2: i32) -> (i32, i32, i32) {
    %c1_i32 = arith.constant 1 : i32
    %0 = arith.muli %arg1, %c1_i32 : i32
    %1 = arith.addi %0, %arg2 : i32
    %c0_i32 = arith.constant 0 : i32
    %c0_i32_0 = arith.constant 0 : i32
    return %arg0, %1, %c0_i32 : i32, i32, i32
  }
  func.func @transform_3(%arg0: i32, %arg1: i32, %arg2: i32) -> (i32, i32, i32, i32) {
    %c0_i32 = arith.constant 0 : i32
    %c0_i32_0 = arith.constant 0 : i32
    %c0_i32_1 = arith.constant 0 : i32
    return %arg0, %arg1, %c0_i32, %c0_i32_0 : i32, i32, i32, i32
  }
}

</mosaic_0001>

<llo_original>
// kernel: tpu_custom_call.1
$region0: #{tpu_custom_call.1}
  #allocation0 [shape = 'u32[]', space=smem, size = 0x4, offset = 0x4, fixed_abs, tag = 'smem constant byte address 0x4 - core index']
  #allocation1 [shape = 'u32[144,128]{1,0:T(1,128)}', space=vmem, size = 0x12000, scoped, tag = 'internal scratch']
  %s0 = inlined_call_operand.vmem [shape: f32[2,1,1,2,2], index: 0, kind: input, shape index: {}]
  %s1 = inlined_call_operand.vmem [shape: f32[128,2], index: 1, kind: input, shape index: {}]
  %s2 = inlined_call_operand.hbm [shape: f32[2,128,128], index: 2, kind: input, shape index: {}]
  %s3 = inlined_call_operand.vmem [shape: f32[2,1,1,1], index: 3, kind: output, shape index: {}]
  %s4 = sld [smem:[#allocation0]]
  $region53: #{tpu_custom_call.1} parent=0
    _
  %s6 = ssub.s32 1, %s4
  %s7 = scalar_select 0, %s6, %s4
  $region1: #{tpu_custom_call.1} parent=0
    #allocation2 [shape = 'u8[131072]{0}', space=vmem, size = 0x20000, scoped, tag = 'input window, operand 2']
    #allocation3 [shape = 's32[2]{0}', space=sflag, size = 0x8, scoped, tag = 'scoped memory for tpu_custom_call.1']
    %8 = vsyncpa [#allocation3], 0
    %s9 = scalar_lea.sflag [#allocation3], 1
    %10 = vsyncpa %s9, 0
    loop: start=0, step=1, limit=4
    $region2: #{tpu_custom_call.1} parent=1 // loop_pre_header
      _
    $region3: #{tpu_custom_call.1} parent=1 // loop_header
      %s12 = sphi 0, %s16
      %p13 = scmp.ge.s32.totalorder %s12, 4
      %s19 = sphi 0, %s38
      %s20 = sphi 0, %s34
      %s21 = sphi 0, %s30
      %s22 = sphi 0, %s19
      %s23 = sphi 0, %s20
      %s24 = sphi 0, %s21
      %s25 = sphi 0, %s22
      %s26 = sphi 0, %s23
      %s27 = sphi 0, %s24
      %s45 = sphi 0, %s47
      %s48 = sphi 0, %s45
      %s49 = sphi 0, %s48
      %s65 = sphi 0, %s49
      %s69 = sphi 0, %s69
      %s71 = sphi 0, %s69
      %s72 = sphi 0, %s71
      %s86 = sphi 0, %s72
      %s96 = sphi 0, %s98
      %s99 = sphi 0, %s96
      %s100 = sphi 0, %s99
      %s116 = sphi 0, %s100
      %s124 = sphi 0, %s126
      %s127 = sphi 0, %s124
      %s128 = sphi 0, %s127
      %s144 = sphi 0, %s128
    $region4: #{tpu_custom_call.1} parent=1 // loop_header_branch
      %15 = sbr.rel (%p13) target = $region8
    $region5: #{tpu_custom_call.1} parent=1 // loop_body
      %s17 = ssub.s32 %s12, 1
      %s18 = ssub.s32 %s12, 2
      %s28 = sadd.s32 1, %s21
      %p29 = scmp.ge.s32.totalorder %s28, 1
      %s30 = scalar_select %p29, 0, %s28
      %s31 = sadd.s32 1, %s20
      %s32 = scalar_select %p29, %s31, %s20
      %p33 = scmp.ge.s32.totalorder %s32, 1
      %s34 = scalar_select %p33, 0, %s32
      %s35 = sadd.s32 1, %s19
      %s36 = scalar_select %p33, %s35, %s19
      %p37 = scmp.ge.s32.totalorder %s36, 2
      %s38 = scalar_select %p37, 0, %s36
      %s39 = ssub.s32 %s19, %s38
      %s40 = ssub.s32 %s20, %s34
      %s41 = sor.u32 %s39, %s40
      %s42 = ssub.s32 %s21, %s30
      %s43 = sor.u32 %s41, %s42
      %p44 = scmp.eq.s32.totalorder %s43, 0
      %s46 = sadd.s32 %s45, 1
      %s47 = scalar_select %p44, %s45, %s46
      %p50 = pneg %p44
      %p51 = scmp.eq.s32.totalorder %s12, 1
      %p52 = por %p50, %p51
      %p53 = scmp.ne.s32.totalorder %s45, %s48
      %p54 = scmp.eq.s32.totalorder %s12, 0
      %p55 = por %p53, %p54
      %p56 = scmp.ne.s32.totalorder %s45, %s48
      %p57 = scmp.eq.s32.totalorder %s17, 1
      %p58 = por %p56, %p57
      %p59 = scmp.ne.s32.totalorder %s48, %s49
      %p60 = scmp.eq.s32.totalorder %s17, 0
      %p61 = por %p59, %p60
      %p62 = scmp.ne.s32.totalorder %s48, %s49
      %p63 = scmp.eq.s32.totalorder %s18, 1
      %p64 = por %p62, %p63
      %p66 = scmp.ne.s32.totalorder %s49, %s65
      %p67 = scmp.eq.s32.totalorder %s18, 0
      %p68 = por %p66, %p67
      %s70 = sadd.s32 %s69, 1
      %p73 = scmp.eq.s32.totalorder %s12, 1
      %p74 = scmp.ne.s32.totalorder %s69, %s71
      %p75 = scmp.eq.s32.totalorder %s12, 0
      %p76 = por %p74, %p75
      %p77 = scmp.ne.s32.totalorder %s69, %s71
      %p78 = scmp.eq.s32.totalorder %s17, 1
      %p79 = por %p77, %p78
      %p80 = scmp.ne.s32.totalorder %s71, %s72
      %p81 = scmp.eq.s32.totalorder %s17, 0
      %p82 = por %p80, %p81
      %p83 = scmp.ne.s32.totalorder %s71, %s72
      %p84 = scmp.eq.s32.totalorder %s18, 1
      %p85 = por %p83, %p84
      %p87 = scmp.ne.s32.totalorder %s72, %s86
      %p88 = scmp.eq.s32.totalorder %s18, 0
      %p89 = por %p87, %p88
      %s90 = sadd.s32 %s20, %s21
      %s91 = sadd.s32 %s34, %s30
      %s92 = ssub.s32 %s19, %s38
      %s93 = ssub.s32 %s90, %s91
      %s94 = sor.u32 %s92, %s93
      %p95 = scmp.eq.s32.totalorder %s94, 0
      %s97 = sadd.s32 %s96, 1
      %s98 = scalar_select %p95, %s96, %s97
      %p101 = pneg %p95
      %p102 = scmp.eq.s32.totalorder %s12, 1
      %p103 = por %p101, %p102
      %p104 = scmp.ne.s32.totalorder %s96, %s99
      %p105 = scmp.eq.s32.totalorder %s12, 0
      %p106 = por %p104, %p105
      %p107 = scmp.ne.s32.totalorder %s96, %s99
      %p108 = scmp.eq.s32.totalorder %s17, 1
      %p109 = por %p107, %p108
      %p110 = scmp.ne.s32.totalorder %s99, %s100
      %p111 = scmp.eq.s32.totalorder %s17, 0
      %p112 = por %p110, %p111
      %p113 = scmp.ne.s32.totalorder %s99, %s100
      %p114 = scmp.eq.s32.totalorder %s18, 1
      %p115 = por %p113, %p114
      %p117 = scmp.ne.s32.totalorder %s100, %s116
      %p118 = scmp.eq.s32.totalorder %s18, 0
      %p119 = por %p117, %p118
      %s120 = ssub.s32 %s19, %s38
      %s121 = ssub.s32 %s20, %s34
      %s122 = sor.u32 %s120, %s121
      %p123 = scmp.eq.s32.totalorder %s122, 0
      %s125 = sadd.s32 %s124, 1
      %s126 = scalar_select %p123, %s124, %s125
      %p129 = pneg %p123
      %p130 = scmp.eq.s32.totalorder %s12, 1
      %p131 = por %p129, %p130
      %p132 = scmp.ne.s32.totalorder %s124, %s127
      %p133 = scmp.eq.s32.totalorder %s12, 0
      %p134 = por %p132, %p133
      %p135 = scmp.ne.s32.totalorder %s124, %s127
      %p136 = scmp.eq.s32.totalorder %s17, 1
      %p137 = por %p135, %p136
      %p138 = scmp.ne.s32.totalorder %s127, %s128
      %p139 = scmp.eq.s32.totalorder %s17, 0
      %p140 = por %p138, %p139
      %p141 = scmp.ne.s32.totalorder %s127, %s128
      %p142 = scmp.eq.s32.totalorder %s18, 1
      %p143 = por %p141, %p142
      %p145 = scmp.ne.s32.totalorder %s128, %s144
      %p146 = scmp.eq.s32.totalorder %s18, 0
      %p147 = por %p145, %p146
      %p148 = scmp.le.s32.totalorder 1, %s12
      %p149 = scmp.lt.s32.totalorder %s12, 3
      %p150 = pnand %p148, %p149
      %p151 = pneg %p150
      // Predicated region
      $region9: #{tpu_custom_call.1} parent=5 // pred_check
        _
      $region10: #{tpu_custom_call.1} parent=5 // pred_check_branch
        %153 = sbr.rel (%p150) target = $region12
      $region11: #{tpu_custom_call.1} parent=5 // pred_region
        %s154 = ssub.s32 %s12, 1
        // Predicated region
        $region13: #{tpu_custom_call.1} parent=11 // pred_check
          %p155 = pneg %p82
        $region14: #{tpu_custom_call.1} parent=11 // pred_check_branch
          %157 = sbr.rel (%p155) target = $region16
        $region15: #{tpu_custom_call.1} parent=11 // pred_region
          _
        $region16: #{tpu_custom_call.1} parent=11 // pred_fallthru
          _
      $region12: #{tpu_custom_call.1} parent=5 // pred_fallthru
        _
      %p158 = scmp.lt.s32.totalorder %s12, 2
      // Predicated region
      $region17: #{tpu_custom_call.1} parent=5 // pred_check
        %p159 = pneg %p158
      $region18: #{tpu_custom_call.1} parent=5 // pred_check_branch
        %161 = sbr.rel (%p159) target = $region20
      $region19: #{tpu_custom_call.1} parent=5 // pred_region
        // Predicated region
        $region21: #{tpu_custom_call.1} parent=19 // pred_check
          %p162 = pneg %p55
        $region22: #{tpu_custom_call.1} parent=19 // pred_check_branch
          %164 = sbr.rel (%p162) target = $region24
        $region23: #{tpu_custom_call.1} parent=19 // pred_region
          %p165 = scmp.lt.s32.totalorder %s19, 1
          %s166 = scalar_select %p165, %s19, 1
          %p167 = scmp.lt.s32.totalorder %s20, 0
          %s168 = scalar_select %p167, %s20, 0
          %p169 = scmp.lt.s32.totalorder %s21, 0
          %s170 = scalar_select %p169, %s21, 0
          %s171 = sadd.s32 %s170, %s168
          %s172 = sadd.s32 %s171, %s166
          %s173 = smul.addr %s172, 2
          %s174 = scalar_lea.vmem %s0, %s173
        $region24: #{tpu_custom_call.1} parent=19 // pred_fallthru
          _
        // Predicated region
        $region25: #{tpu_custom_call.1} parent=19 // pred_check
          %p175 = pneg %p106
        $region26: #{tpu_custom_call.1} parent=19 // pred_check_branch
          %177 = sbr.rel (%p175) target = $region28
        $region27: #{tpu_custom_call.1} parent=19 // pred_region
          %s178 = sand.u32 %s96, 1
          %s179 = scalar_lea.sflag [#allocation3], %s178
          %s180 = sand.u32 %s96, 1
          %s181 = smul.addr %s180, 128
          %s182 = scalar_lea.vmem [#allocation2], %s181
          %s183 = sadd.s32 %s20, %s21
          %s184 = smul.u32 16, %s183
          %s186 = ssub.s32 2048, 2048
          %187 = vsyncadd %s179, %s186
          %s188 = smul.addr %s19, 16
          %s189 = sadd.s32 %s184, %s188
          %s190 = smul.addr %s189, 128
          %s191 = scalar_lea.hbm %s2, %s190
          %s192 = sshll.u32 %s182, 4
          %s193 = int_to_ptr.vmem [resolvable:$true] %s192
          %198 = dma.hbm_to_vmem [thread:$0]  %s191, 2048, %s193, %s179, 128, 128, 8
        $region28: #{tpu_custom_call.1} parent=19 // pred_fallthru
          _
      $region20: #{tpu_custom_call.1} parent=5 // pred_fallthru
        _
      %p199 = scmp.le.s32.totalorder 1, %s12
      %p200 = scmp.lt.s32.totalorder %s12, 3
      %p201 = pnand %p199, %p200
      %p202 = pneg %p201
      // Predicated region
      $region29: #{tpu_custom_call.1} parent=5 // pred_check
        _
      $region30: #{tpu_custom_call.1} parent=5 // pred_check_branch
        %204 = sbr.rel (%p201) target = $region32
      $region31: #{tpu_custom_call.1} parent=5 // pred_region
        %s205 = ssub.s32 %s12, 1
        %s206 = sand.u32 %s99, 1
        %s207 = scalar_lea.sflag [#allocation3], %s206
        %s208 = sand.u32 %s99, 1
        %s209 = smul.addr %s208, 128
        %s210 = scalar_lea.vmem [#allocation2], %s209
        // Predicated region
        $region33: #{tpu_custom_call.1} parent=31 // pred_check
          %p211 = pneg %p112
        $region34: #{tpu_custom_call.1} parent=31 // pred_check_branch
          %213 = sbr.rel (%p211) target = $region36
        $region35: #{tpu_custom_call.1} parent=31 // pred_region
          %214 = dma.done %s207, 2048
        $region36: #{tpu_custom_call.1} parent=31 // pred_fallthru
          _
        %p215 = scmp.lt.s32.totalorder %s22, 1
        %s216 = scalar_select %p215, %s22, 1
        %p217 = scmp.lt.s32.totalorder %s23, 0
        %s218 = scalar_select %p217, %s23, 0
        %p219 = scmp.lt.s32.totalorder %s24, 0
        %s220 = scalar_select %p219, %s24, 0
        %s221 = sadd.s32 %s220, %s218
        %s222 = sadd.s32 %s221, %s216
        %s223 = smul.addr %s222, 2
        %s224 = scalar_lea.vmem %s0, %s223
        %p225 = pneg %p61
        %p226 = pneg %p58
        %p227 = pneg %p82
        %p228 = pneg %p79
        %s229 = sand.u32 %s99, 1
        %s230 = scalar_lea.sflag [#allocation3], %s229
        %s231 = sand.u32 %s99, 1
        %s232 = smul.addr %s231, 128
        %s233 = scalar_lea.vmem [#allocation2], %s232
        %p234 = pneg %p112
        %p235 = pneg %p109
        %p236 = pneg %p140
        %p237 = pneg %p137
        %p238 = scmp.lt.s32.totalorder %s22, 1
        %s239 = scalar_select %p238, %s22, 1
        %p240 = scmp.lt.s32.totalorder %s23, 0
        %s241 = scalar_select %p240, %s23, 0
        %s242 = sadd.s32 %s241, %s239
        %s243 = scalar_lea.vmem %s3, %s242
        %p244 = scmp.lt.s32.totalorder %s22, 1
        %s245 = scalar_select %p244, %s22, 1
        %p246 = scmp.lt.s32.totalorder %s23, 0
        %s247 = scalar_select %p246, %s23, 0
        %p248 = scmp.lt.s32.totalorder %s24, 0
        %s249 = scalar_select %p248, %s24, 0
        %s250 = sadd.s32 %s249, %s247
        %s251 = sadd.s32 %s250, %s245
        %s252 = smul.addr %s251, 2
        %s253 = scalar_lea.vmem %s0, %s252
        %s254 = sadd.s32 %s23, %s24
        %s255 = smul.u32 16, %s254
        %p256 = scmp.lt.s32.totalorder %s22, 1
        %s257 = scalar_select %p256, %s22, 1
        %p258 = scmp.lt.s32.totalorder %s23, 0
        %s259 = scalar_select %p258, %s23, 0
        %s260 = sadd.s32 %s259, %s257
        %s261 = scalar_lea.vmem %s3, %s260
        %p262 = scmp.eq.s32.totalorder %s24, 0
        // Predicated region
        $region37: #{tpu_custom_call.1} parent=31 // pred_check
          %p263 = pneg %p262
        $region38: #{tpu_custom_call.1} parent=31 // pred_check_branch
          %265 = sbr.rel (%p263) target = $region40
        $region39: #{tpu_custom_call.1} parent=31 // pred_region
          %vm266 = vcmask 0
          %267 = vst.msk [vmem:[%s261] sm:$0x1] %vm266, 0.0
        $region40: #{tpu_custom_call.1} parent=31 // pred_fallthru
          _
        %v268 = vld [vmem:[%s210] sm:$0xff]
        %v269 = vld [vmem:[%s210 + $0x8] sm:$0xff]
        %v270 = vld [vmem:[%s210 + $0x10] sm:$0xff]
        %v271 = vld [vmem:[%s210 + $0x18] sm:$0xff]
        %v272 = vld [vmem:[%s210 + $0x20] sm:$0xff]
        %v273 = vld [vmem:[%s210 + $0x28] sm:$0xff]
        %v274 = vld [vmem:[%s210 + $0x30] sm:$0xff]
        %v275 = vld [vmem:[%s210 + $0x38] sm:$0xff]
        %v276 = vld [vmem:[%s210 + $0x40] sm:$0xff]
        %v277 = vld [vmem:[%s210 + $0x48] sm:$0xff]
        %v278 = vld [vmem:[%s210 + $0x50] sm:$0xff]
        %v279 = vld [vmem:[%s210 + $0x58] sm:$0xff]
        %v280 = vld [vmem:[%s210 + $0x60] sm:$0xff]
        %v281 = vld [vmem:[%s210 + $0x68] sm:$0xff]
        %v282 = vld [vmem:[%s210 + $0x70] sm:$0xff]
        %v283 = vld [vmem:[%s210 + $0x78] sm:$0xff]
        %v284 = vadd.f32 %v268, %v269
        %v285 = vadd.f32 %v284, %v270
        %v286 = vadd.f32 %v285, %v271
        %v287 = vadd.f32 %v286, %v272
        %v288 = vadd.f32 %v287, %v273
        %v289 = vadd.f32 %v288, %v274
        %v290 = vadd.f32 %v289, %v275
        %v291 = vrot.slane %v290, 4
        %v292 = vadd.f32 %v290, %v291
        %v293 = vrot.slane %v292, 2
        %v294 = vadd.f32 %v292, %v293
        %v295 = vrot.slane %v294, 1
        %v296 = vadd.f32 %v294, %v295
        %v297 = vadd.f32 %v276, %v277
        %v298 = vadd.f32 %v297, %v278
        %v299 = vadd.f32 %v298, %v279
        %v300 = vadd.f32 %v299, %v280
        %v301 = vadd.f32 %v300, %v281
        %v302 = vadd.f32 %v301, %v282
        %v303 = vadd.f32 %v302, %v283
        %v304 = vrot.slane %v303, 4
        %v305 = vadd.f32 %v303, %v304
        %v306 = vrot.slane %v305, 2
        %v307 = vadd.f32 %v305, %v306
        %v308 = vrot.slane %v307, 1
        %v309 = vadd.f32 %v307, %v308
        %v310 = vld [vmem:[%s1] sm:$0xff]
        %v311 = vld [vmem:[%s1 + $0x8] sm:$0xff]
        %v312 = vld [vmem:[%s1 + $0x10] sm:$0xff]
        %v313 = vld [vmem:[%s1 + $0x18] sm:$0xff]
        %v314 = vld [vmem:[%s1 + $0x20] sm:$0xff]
        %v315 = vld [vmem:[%s1 + $0x28] sm:$0xff]
        %v316 = vld [vmem:[%s1 + $0x30] sm:$0xff]
        %v317 = vld [vmem:[%s1 + $0x38] sm:$0xff]
        %v318 = vld [vmem:[%s1 + $0x40] sm:$0xff]
        %v319 = vld [vmem:[%s1 + $0x48] sm:$0xff]
        %v320 = vld [vmem:[%s1 + $0x50] sm:$0xff]
        %v321 = vld [vmem:[%s1 + $0x58] sm:$0xff]
        %v322 = vld [vmem:[%s1 + $0x60] sm:$0xff]
        %v323 = vld [vmem:[%s1 + $0x68] sm:$0xff]
        %v324 = vld [vmem:[%s1 + $0x70] sm:$0xff]
        %v325 = vld [vmem:[%s1 + $0x78] sm:$0xff]
        %vm328 = vcmask 1041409
        %v329 = vsel %vm328, %v309, %v296
        %331 = vmatprep.subr.mxu0 0.0
        %v332 = vand.u32 %v310, 4294901760
        %333 = vmatpush1.msra.mxu0 %v332
        %334 = vmatprep.subr.mxu0 0.0
        %v335 = vand.u32 %v311, 4294901760
        %336 = vmatpush1.msra.mxu0 %v335
        %337 = vmatprep.subr.mxu0 0.0
        %v338 = vand.u32 %v312, 4294901760
        %339 = vmatpush1.msra.mxu0 %v338
        %340 = vmatprep.subr.mxu0 0.0
        %v341 = vand.u32 %v313, 4294901760
        %342 = vmatpush1.msra.mxu0 %v341
        %343 = vmatprep.subr.mxu0 0.0
        %v344 = vand.u32 %v314, 4294901760
        %345 = vmatpush1.msra.mxu0 %v344
        %346 = vmatprep.subr.mxu0 0.0
        %v347 = vand.u32 %v315, 4294901760
        %348 = vmatpush1.msra.mxu0 %v347
        %349 = vmatprep.subr.mxu0 0.0
        %v350 = vand.u32 %v316, 4294901760
        %351 = vmatpush1.msra.mxu0 %v350
        %352 = vmatprep.subr.mxu0 0.0
        %v353 = vand.u32 %v317, 4294901760
        %354 = vmatpush1.msra.mxu0 %v353
        %355 = vmatprep.subr.mxu0 0.0
        %v356 = vand.u32 %v318, 4294901760
        %357 = vmatpush1.msra.mxu0 %v356
        %358 = vmatprep.subr.mxu0 0.0
        %v359 = vand.u32 %v319, 4294901760
        %360 = vmatpush1.msra.mxu0 %v359
        %361 = vmatprep.subr.mxu0 0.0
        %v362 = vand.u32 %v320, 4294901760
        %363 = vmatpush1.msra.mxu0 %v362
        %364 = vmatprep.subr.mxu0 0.0
        %v365 = vand.u32 %v321, 4294901760
        %366 = vmatpush1.msra.mxu0 %v365
        %367 = vmatprep.subr.mxu0 0.0
        %v368 = vand.u32 %v322, 4294901760
        %369 = vmatpush1.msra.mxu0 %v368
        %370 = vmatprep.subr.mxu0 0.0
        %v371 = vand.u32 %v323, 4294901760
        %372 = vmatpush1.msra.mxu0 %v371
        %373 = vmatprep.subr.mxu0 0.0
        %v374 = vand.u32 %v324, 4294901760
        %375 = vmatpush1.msra.mxu0 %v374
        %376 = vmatprep.subr.mxu0 0.0
        %v377 = vand.u32 %v325, 4294901760
        %378 = vmatpush1.msra.mxu0 %v377
        %379 = vmatprep.subr.mxu0 0.0
        %380 = vmatpush1.msra.mxu0 0.0
        %381 = vmatprep.subr.mxu0 0.0
        %382 = vmatpush1.msra.mxu0 0.0
        %383 = vmatprep.subr.mxu0 0.0
        %384 = vmatpush1.msra.mxu0 0.0
        %385 = vmatprep.subr.mxu0 0.0
        %386 = vmatpush1.msra.mxu0 0.0
        %387 = vmatprep.subr.mxu0 0.0
        %388 = vmatpush1.msra.mxu0 0.0
        %389 = vmatprep.subr.mxu0 0.0
        %390 = vmatpush1.msra.mxu0 0.0
        %391 = vmatprep.subr.mxu0 0.0
        %392 = vmatpush1.msra.mxu0 0.0
        %393 = vmatprep.subr.mxu0 0.0
        %394 = vmatpush1.msra.mxu0 0.0
        %395 = vmatprep.subr.mxu0 0.0
        %396 = vmatpush1.msra.mxu0 0.0
        %397 = vmatprep.subr.mxu0 0.0
        %398 = vmatpush1.msra.mxu0 0.0
        %399 = vmatprep.subr.mxu0 0.0
        %400 = vmatpush1.msra.mxu0 0.0
        %401 = vmatprep.subr.mxu0 0.0
        %402 = vmatpush1.msra.mxu0 0.0
        %403 = vmatprep.subr.mxu0 0.0
        %404 = vmatpush1.msra.mxu0 0.0
        %405 = vmatprep.subr.mxu0 0.0
        %406 = vmatpush1.msra.mxu0 0.0
        %407 = vmatprep.subr.mxu0 0.0
        %408 = vmatpush1.msra.mxu0 0.0
        %409 = vmatprep.subr.mxu0 0.0
        %410 = vmatpush1.msra.mxu0 0.0
        %411 = vmatprep.mubr.f32.mxu0 0.0
        %v412 = vand.u32 %v329, 4294901760
        %v413 = vsub.f32 %v329, %v412
        %v414 = vand.u32 %v413, 4294901760
        %v415 = vsub.f32 %v413, %v414
        %v416 = vand.u32 %v415, 4294901760
        %417 = vmatmul.mubr.f32.gmra.mrb[0].mxu0 %v416
        %v418 = vpop.f32.mrb[0].mxu0
        %v419 = vadd.f32 0.0, %v418
        %v420 = vpop.f32.mrb[0].mxu0
        %421 = vdwg.mxu0
        %422 = vmatprep.subr.mxu0 0.0
        %v423 = vand.u32 %v310, 4294901760
        %v424 = vsub.f32 %v310, %v423
        %v425 = vand.u32 %v424, 4294901760
        %v426 = vsub.f32 %v424, %v425
        %v427 = vand.u32 %v426, 4294901760
        %428 = vmatpush1.msra.mxu0 %v427
        %429 = vmatprep.subr.mxu0 0.0
        %v430 = vand.u32 %v311, 4294901760
        %v431 = vsub.f32 %v311, %v430
        %v432 = vand.u32 %v431, 4294901760
        %v433 = vsub.f32 %v431, %v432
        %v434 = vand.u32 %v433, 4294901760
        %435 = vmatpush1.msra.mxu0 %v434
        %436 = vmatprep.subr.mxu0 0.0
        %v437 = vand.u32 %v312, 4294901760
        %v438 = vsub.f32 %v312, %v437
        %v439 = vand.u32 %v438, 4294901760
        %v440 = vsub.f32 %v438, %v439
        %v441 = vand.u32 %v440, 4294901760
        %442 = vmatpush1.msra.mxu0 %v441
        %443 = vmatprep.subr.mxu0 0.0
        %v444 = vand.u32 %v313, 4294901760
        %v445 = vsub.f32 %v313, %v444
        %v446 = vand.u32 %v445, 4294901760
        %v447 = vsub.f32 %v445, %v446
        %v448 = vand.u32 %v447, 4294901760
        %449 = vmatpush1.msra.mxu0 %v448
        %450 = vmatprep.subr.mxu0 0.0
        %v451 = vand.u32 %v314, 4294901760
        %v452 = vsub.f32 %v314, %v451
        %v453 = vand.u32 %v452, 4294901760
        %v454 = vsub.f32 %v452, %v453
        %v455 = vand.u32 %v454, 4294901760
        %456 = vmatpush1.msra.mxu0 %v455
        %457 = vmatprep.subr.mxu0 0.0
        %v458 = vand.u32 %v315, 4294901760
        %v459 = vsub.f32 %v315, %v458
        %v460 = vand.u32 %v459, 4294901760
        %v461 = vsub.f32 %v459, %v460
        %v462 = vand.u32 %v461, 4294901760
        %463 = vmatpush1.msra.mxu0 %v462
        %464 = vmatprep.subr.mxu0 0.0
        %v465 = vand.u32 %v316, 4294901760
        %v466 = vsub.f32 %v316, %v465
        %v467 = vand.u32 %v466, 4294901760
        %v468 = vsub.f32 %v466, %v467
        %v469 = vand.u32 %v468, 4294901760
        %470 = vmatpush1.msra.mxu0 %v469
        %471 = vmatprep.subr.mxu0 0.0
        %v472 = vand.u32 %v317, 4294901760
        %v473 = vsub.f32 %v317, %v472
        %v474 = vand.u32 %v473, 4294901760
        %v475 = vsub.f32 %v473, %v474
        %v476 = vand.u32 %v475, 4294901760
        %477 = vmatpush1.msra.mxu0 %v476
        %478 = vmatprep.subr.mxu0 0.0
        %v479 = vand.u32 %v318, 4294901760
        %v480 = vsub.f32 %v318, %v479
        %v481 = vand.u32 %v480, 4294901760
        %v482 = vsub.f32 %v480, %v481
        %v483 = vand.u32 %v482, 4294901760
        %484 = vmatpush1.msra.mxu0 %v483
        %485 = vmatprep.subr.mxu0 0.0
        %v486 = vand.u32 %v319, 4294901760
        %v487 = vsub.f32 %v319, %v486
        %v488 = vand.u32 %v487, 4294901760
        %v489 = vsub.f32 %v487, %v488
        %v490 = vand.u32 %v489, 4294901760
        %491 = vmatpush1.msra.mxu0 %v490
        %492 = vmatprep.subr.mxu0 0.0
        %v493 = vand.u32 %v320, 4294901760
        %v494 = vsub.f32 %v320, %v493
        %v495 = vand.u32 %v494, 4294901760
        %v496 = vsub.f32 %v494, %v495
        %v497 = vand.u32 %v496, 4294901760
        %498 = vmatpush1.msra.mxu0 %v497
        %499 = vmatprep.subr.mxu0 0.0
        %v500 = vand.u32 %v321, 4294901760
        %v501 = vsub.f32 %v321, %v500
        %v502 = vand.u32 %v501, 4294901760
        %v503 = vsub.f32 %v501, %v502
        %v504 = vand.u32 %v503, 4294901760
        %505 = vmatpush1.msra.mxu0 %v504
        %506 = vmatprep.subr.mxu0 0.0
        %v507 = vand.u32 %v322, 4294901760
        %v508 = vsub.f32 %v322, %v507
        %v509 = vand.u32 %v508, 4294901760
        %v510 = vsub.f32 %v508, %v509
        %v511 = vand.u32 %v510, 4294901760
        %512 = vmatpush1.msra.mxu0 %v511
        %513 = vmatprep.subr.mxu0 0.0
        %v514 = vand.u32 %v323, 4294901760
        %v515 = vsub.f32 %v323, %v514
        %v516 = vand.u32 %v515, 4294901760
        %v517 = vsub.f32 %v515, %v516
        %v518 = vand.u32 %v517, 4294901760
        %519 = vmatpush1.msra.mxu0 %v518
        %520 = vmatprep.subr.mxu0 0.0
        %v521 = vand.u32 %v324, 4294901760
        %v522 = vsub.f32 %v324, %v521
        %v523 = vand.u32 %v522, 4294901760
        %v524 = vsub.f32 %v522, %v523
        %v525 = vand.u32 %v524, 4294901760
        %526 = vmatpush1.msra.mxu0 %v525
        %527 = vmatprep.subr.mxu0 0.0
        %v528 = vand.u32 %v325, 4294901760
        %v529 = vsub.f32 %v325, %v528
        %v530 = vand.u32 %v529, 4294901760
        %v531 = vsub.f32 %v529, %v530
        %v532 = vand.u32 %v531, 4294901760
        %533 = vmatpush1.msra.mxu0 %v532
        %534 = vmatprep.subr.mxu0 0.0
        %535 = vmatpush1.msra.mxu0 0.0
        %536 = vmatprep.subr.mxu0 0.0
        %537 = vmatpush1.msra.mxu0 0.0
        %538 = vmatprep.subr.mxu0 0.0
        %539 = vmatpush1.msra.mxu0 0.0
        %540 = vmatprep.subr.mxu0 0.0
        %541 = vmatpush1.msra.mxu0 0.0
        %542 = vmatprep.subr.mxu0 0.0
        %543 = vmatpush1.msra.mxu0 0.0
        %544 = vmatprep.subr.mxu0 0.0
        %545 = vmatpush1.msra.mxu0 0.0
        %546 = vmatprep.subr.mxu0 0.0
        %547 = vmatpush1.msra.mxu0 0.0
        %548 = vmatprep.subr.mxu0 0.0
        %549 = vmatpush1.msra.mxu0 0.0
        %550 = vmatprep.subr.mxu0 0.0
        %551 = vmatpush1.msra.mxu0 0.0
        %552 = vmatprep.subr.mxu0 0.0
        %553 = vmatpush1.msra.mxu0 0.0
        %554 = vmatprep.subr.mxu0 0.0
        %555 = vmatpush1.msra.mxu0 0.0
        %556 = vmatprep.subr.mxu0 0.0
        %557 = vmatpush1.msra.mxu0 0.0
        %558 = vmatprep.subr.mxu0 0.0
        %559 = vmatpush1.msra.mxu0 0.0
        %560 = vmatprep.subr.mxu0 0.0
        %561 = vmatpush1.msra.mxu0 0.0
        %562 = vmatprep.subr.mxu0 0.0
        %563 = vmatpush1.msra.mxu0 0.0
        %564 = vmatprep.subr.mxu0 0.0
        %565 = vmatpush1.msra.mxu0 0.0
        %566 = vmatprep.mubr.f32.mxu0 0.0
        %v567 = vand.u32 %v329, 4294901760
        %568 = vmatmul.mubr.f32.gmra.mrb[0].mxu0 %v567
        %v569 = vpop.f32.mrb[0].mxu0
        %v570 = vadd.f32 %v419, %v569
        %v571 = vpop.f32.mrb[0].mxu0
        %572 = vdwg.mxu0
        %573 = vmatprep.subr.mxu0 0.0
        %v574 = vand.u32 %v310, 4294901760
        %v575 = vsub.f32 %v310, %v574
        %576 = vmatpush1.msra.mxu0 %v575
        %577 = vmatprep.subr.mxu0 0.0
        %v578 = vand.u32 %v311, 4294901760
        %v579 = vsub.f32 %v311, %v578
        %580 = vmatpush1.msra.mxu0 %v579
        %581 = vmatprep.subr.mxu0 0.0
        %v582 = vand.u32 %v312, 4294901760
        %v583 = vsub.f32 %v312, %v582
        %584 = vmatpush1.msra.mxu0 %v583
        %585 = vmatprep.subr.mxu0 0.0
        %v586 = vand.u32 %v313, 4294901760
        %v587 = vsub.f32 %v313, %v586
        %588 = vmatpush1.msra.mxu0 %v587
        %589 = vmatprep.subr.mxu0 0.0
        %v590 = vand.u32 %v314, 4294901760
        %v591 = vsub.f32 %v314, %v590
        %592 = vmatpush1.msra.mxu0 %v591
        %593 = vmatprep.subr.mxu0 0.0
        %v594 = vand.u32 %v315, 4294901760
        %v595 = vsub.f32 %v315, %v594
        %596 = vmatpush1.msra.mxu0 %v595
        %597 = vmatprep.subr.mxu0 0.0
        %v598 = vand.u32 %v316, 4294901760
        %v599 = vsub.f32 %v316, %v598
        %600 = vmatpush1.msra.mxu0 %v599
        %601 = vmatprep.subr.mxu0 0.0
        %v602 = vand.u32 %v317, 4294901760
        %v603 = vsub.f32 %v317, %v602
        %604 = vmatpush1.msra.mxu0 %v603
        %605 = vmatprep.subr.mxu0 0.0
        %v606 = vand.u32 %v318, 4294901760
        %v607 = vsub.f32 %v318, %v606
        %608 = vmatpush1.msra.mxu0 %v607
        %609 = vmatprep.subr.mxu0 0.0
        %v610 = vand.u32 %v319, 4294901760
        %v611 = vsub.f32 %v319, %v610
        %612 = vmatpush1.msra.mxu0 %v611
        %613 = vmatprep.subr.mxu0 0.0
        %v614 = vand.u32 %v320, 4294901760
        %v615 = vsub.f32 %v320, %v614
        %616 = vmatpush1.msra.mxu0 %v615
        %617 = vmatprep.subr.mxu0 0.0
        %v618 = vand.u32 %v321, 4294901760
        %v619 = vsub.f32 %v321, %v618
        %620 = vmatpush1.msra.mxu0 %v619
        %621 = vmatprep.subr.mxu0 0.0
        %v622 = vand.u32 %v322, 4294901760
        %v623 = vsub.f32 %v322, %v622
        %624 = vmatpush1.msra.mxu0 %v623
        %625 = vmatprep.subr.mxu0 0.0
        %v626 = vand.u32 %v323, 4294901760
        %v627 = vsub.f32 %v323, %v626
        %628 = vmatpush1.msra.mxu0 %v627
        %629 = vmatprep.subr.mxu0 0.0
        %v630 = vand.u32 %v324, 4294901760
        %v631 = vsub.f32 %v324, %v630
        %632 = vmatpush1.msra.mxu0 %v631
        %633 = vmatprep.subr.mxu0 0.0
        %v634 = vand.u32 %v325, 4294901760
        %v635 = vsub.f32 %v325, %v634
        %636 = vmatpush1.msra.mxu0 %v635
        %637 = vmatprep.subr.mxu0 0.0
        %638 = vmatpush1.msra.mxu0 0.0
        %639 = vmatprep.subr.mxu0 0.0
        %640 = vmatpush1.msra.mxu0 0.0
        %641 = vmatprep.subr.mxu0 0.0
        %642 = vmatpush1.msra.mxu0 0.0
        %643 = vmatprep.subr.mxu0 0.0
        %644 = vmatpush1.msra.mxu0 0.0
        %645 = vmatprep.subr.mxu0 0.0
        %646 = vmatpush1.msra.mxu0 0.0
        %647 = vmatprep.subr.mxu0 0.0
        %648 = vmatpush1.msra.mxu0 0.0
        %649 = vmatprep.subr.mxu0 0.0
        %650 = vmatpush1.msra.mxu0 0.0
        %651 = vmatprep.subr.mxu0 0.0
        %652 = vmatpush1.msra.mxu0 0.0
        %653 = vmatprep.subr.mxu0 0.0
        %654 = vmatpush1.msra.mxu0 0.0
        %655 = vmatprep.subr.mxu0 0.0
        %656 = vmatpush1.msra.mxu0 0.0
        %657 = vmatprep.subr.mxu0 0.0
        %658 = vmatpush1.msra.mxu0 0.0
        %659 = vmatprep.subr.mxu0 0.0
        %660 = vmatpush1.msra.mxu0 0.0
        %661 = vmatprep.subr.mxu0 0.0
        %662 = vmatpush1.msra.mxu0 0.0
        %663 = vmatprep.subr.mxu0 0.0
        %664 = vmatpush1.msra.mxu0 0.0
        %665 = vmatprep.subr.mxu0 0.0
        %666 = vmatpush1.msra.mxu0 0.0
        %667 = vmatprep.subr.mxu0 0.0
        %668 = vmatpush1.msra.mxu0 0.0
        %669 = vmatprep.mubr.f32.mxu0 0.0
        %v670 = vand.u32 %v329, 4294901760
        %v671 = vsub.f32 %v329, %v670
        %672 = vmatmul.mubr.f32.gmra.mrb[0].mxu0 %v671
        %v673 = vpop.f32.mrb[0].mxu0
        %v674 = vadd.f32 %v570, %v673
        %v675 = vpop.f32.mrb[0].mxu0
        %676 = vdwg.mxu0
        %677 = vmatprep.subr.mxu0 0.0
        %v678 = vand.u32 %v310, 4294901760
        %679 = vmatpush1.msra.mxu0 %v678
        %680 = vmatprep.subr.mxu0 0.0
        %v681 = vand.u32 %v311, 4294901760
        %682 = vmatpush1.msra.mxu0 %v681
        %683 = vmatprep.subr.mxu0 0.0
        %v684 = vand.u32 %v312, 4294901760
        %685 = vmatpush1.msra.mxu0 %v684
        %686 = vmatprep.subr.mxu0 0.0
        %v687 = vand.u32 %v313, 4294901760
        %688 = vmatpush1.msra.mxu0 %v687
        %689 = vmatprep.subr.mxu0 0.0
        %v690 = vand.u32 %v314, 4294901760
        %691 = vmatpush1.msra.mxu0 %v690
        %692 = vmatprep.subr.mxu0 0.0
        %v693 = vand.u32 %v315, 4294901760
        %694 = vmatpush1.msra.mxu0 %v693
        %695 = vmatprep.subr.mxu0 0.0
        %v696 = vand.u32 %v316, 4294901760
        %697 = vmatpush1.msra.mxu0 %v696
        %698 = vmatprep.subr.mxu0 0.0
        %v699 = vand.u32 %v317, 4294901760
        %700 = vmatpush1.msra.mxu0 %v699
        %701 = vmatprep.subr.mxu0 0.0
        %v702 = vand.u32 %v318, 4294901760
        %703 = vmatpush1.msra.mxu0 %v702
        %704 = vmatprep.subr.mxu0 0.0
        %v705 = vand.u32 %v319, 4294901760
        %706 = vmatpush1.msra.mxu0 %v705
        %707 = vmatprep.subr.mxu0 0.0
        %v708 = vand.u32 %v320, 4294901760
        %709 = vmatpush1.msra.mxu0 %v708
        %710 = vmatprep.subr.mxu0 0.0
        %v711 = vand.u32 %v321, 4294901760
        %712 = vmatpush1.msra.mxu0 %v711
        %713 = vmatprep.subr.mxu0 0.0
        %v714 = vand.u32 %v322, 4294901760
        %715 = vmatpush1.msra.mxu0 %v714
        %716 = vmatprep.subr.mxu0 0.0
        %v717 = vand.u32 %v323, 4294901760
        %718 = vmatpush1.msra.mxu0 %v717
        %719 = vmatprep.subr.mxu0 0.0
        %v720 = vand.u32 %v324, 4294901760
        %721 = vmatpush1.msra.mxu0 %v720
        %722 = vmatprep.subr.mxu0 0.0
        %v723 = vand.u32 %v325, 4294901760
        %724 = vmatpush1.msra.mxu0 %v723
        %725 = vmatprep.subr.mxu0 0.0
        %726 = vmatpush1.msra.mxu0 0.0
        %727 = vmatprep.subr.mxu0 0.0
        %728 = vmatpush1.msra.mxu0 0.0
        %729 = vmatprep.subr.mxu0 0.0
        %730 = vmatpush1.msra.mxu0 0.0
        %731 = vmatprep.subr.mxu0 0.0
        %732 = vmatpush1.msra.mxu0 0.0
        %733 = vmatprep.subr.mxu0 0.0
        %734 = vmatpush1.msra.mxu0 0.0
        %735 = vmatprep.subr.mxu0 0.0
        %736 = vmatpush1.msra.mxu0 0.0
        %737 = vmatprep.subr.mxu0 0.0
        %738 = vmatpush1.msra.mxu0 0.0
        %739 = vmatprep.subr.mxu0 0.0
        %740 = vmatpush1.msra.mxu0 0.0
        %741 = vmatprep.subr.mxu0 0.0
        %742 = vmatpush1.msra.mxu0 0.0
        %743 = vmatprep.subr.mxu0 0.0
        %744 = vmatpush1.msra.mxu0 0.0
        %745 = vmatprep.subr.mxu0 0.0
        %746 = vmatpush1.msra.mxu0 0.0
        %747 = vmatprep.subr.mxu0 0.0
        %748 = vmatpush1.msra.mxu0 0.0
        %749 = vmatprep.subr.mxu0 0.0
        %750 = vmatpush1.msra.mxu0 0.0
        %751 = vmatprep.subr.mxu0 0.0
        %752 = vmatpush1.msra.mxu0 0.0
        %753 = vmatprep.subr.mxu0 0.0
        %754 = vmatpush1.msra.mxu0 0.0
        %755 = vmatprep.subr.mxu0 0.0
        %756 = vmatpush1.msra.mxu0 0.0
        %757 = vmatprep.mubr.f32.mxu0 0.0
        %v758 = vand.u32 %v329, 4294901760
        %v759 = vsub.f32 %v329, %v758
        %v760 = vand.u32 %v759, 4294901760
        %761 = vmatmul.mubr.f32.gmra.mrb[0].mxu0 %v760
        %v762 = vpop.f32.mrb[0].mxu0
        %v763 = vadd.f32 %v674, %v762
        %v764 = vpop.f32.mrb[0].mxu0
        %765 = vdwg.mxu0
        %766 = vmatprep.subr.mxu0 0.0
        %v767 = vand.u32 %v310, 4294901760
        %v768 = vsub.f32 %v310, %v767
        %v769 = vand.u32 %v768, 4294901760
        %770 = vmatpush1.msra.mxu0 %v769
        %771 = vmatprep.subr.mxu0 0.0
        %v772 = vand.u32 %v311, 4294901760
        %v773 = vsub.f32 %v311, %v772
        %v774 = vand.u32 %v773, 4294901760
        %775 = vmatpush1.msra.mxu0 %v774
        %776 = vmatprep.subr.mxu0 0.0
        %v777 = vand.u32 %v312, 4294901760
        %v778 = vsub.f32 %v312, %v777
        %v779 = vand.u32 %v778, 4294901760
        %780 = vmatpush1.msra.mxu0 %v779
        %781 = vmatprep.subr.mxu0 0.0
        %v782 = vand.u32 %v313, 4294901760
        %v783 = vsub.f32 %v313, %v782
        %v784 = vand.u32 %v783, 4294901760
        %785 = vmatpush1.msra.mxu0 %v784
        %786 = vmatprep.subr.mxu0 0.0
        %v787 = vand.u32 %v314, 4294901760
        %v788 = vsub.f32 %v314, %v787
        %v789 = vand.u32 %v788, 4294901760
        %790 = vmatpush1.msra.mxu0 %v789
        %791 = vmatprep.subr.mxu0 0.0
        %v792 = vand.u32 %v315, 4294901760
        %v793 = vsub.f32 %v315, %v792
        %v794 = vand.u32 %v793, 4294901760
        %795 = vmatpush1.msra.mxu0 %v794
        %796 = vmatprep.subr.mxu0 0.0
        %v797 = vand.u32 %v316, 4294901760
        %v798 = vsub.f32 %v316, %v797
        %v799 = vand.u32 %v798, 4294901760
        %800 = vmatpush1.msra.mxu0 %v799
        %801 = vmatprep.subr.mxu0 0.0
        %v802 = vand.u32 %v317, 4294901760
        %v803 = vsub.f32 %v317, %v802
        %v804 = vand.u32 %v803, 4294901760
        %805 = vmatpush1.msra.mxu0 %v804
        %806 = vmatprep.subr.mxu0 0.0
        %v807 = vand.u32 %v318, 4294901760
        %v808 = vsub.f32 %v318, %v807
        %v809 = vand.u32 %v808, 4294901760
        %810 = vmatpush1.msra.mxu0 %v809
        %811 = vmatprep.subr.mxu0 0.0
        %v812 = vand.u32 %v319, 4294901760
        %v813 = vsub.f32 %v319, %v812
        %v814 = vand.u32 %v813, 4294901760
        %815 = vmatpush1.msra.mxu0 %v814
        %816 = vmatprep.subr.mxu0 0.0
        %v817 = vand.u32 %v320, 4294901760
        %v818 = vsub.f32 %v320, %v817
        %v819 = vand.u32 %v818, 4294901760
        %820 = vmatpush1.msra.mxu0 %v819
        %821 = vmatprep.subr.mxu0 0.0
        %v822 = vand.u32 %v321, 4294901760
        %v823 = vsub.f32 %v321, %v822
        %v824 = vand.u32 %v823, 4294901760
        %825 = vmatpush1.msra.mxu0 %v824
        %826 = vmatprep.subr.mxu0 0.0
        %v827 = vand.u32 %v322, 4294901760
        %v828 = vsub.f32 %v322, %v827
        %v829 = vand.u32 %v828, 4294901760
        %830 = vmatpush1.msra.mxu0 %v829
        %831 = vmatprep.subr.mxu0 0.0
        %v832 = vand.u32 %v323, 4294901760
        %v833 = vsub.f32 %v323, %v832
        %v834 = vand.u32 %v833, 4294901760
        %835 = vmatpush1.msra.mxu0 %v834
        %836 = vmatprep.subr.mxu0 0.0
        %v837 = vand.u32 %v324, 4294901760
        %v838 = vsub.f32 %v324, %v837
        %v839 = vand.u32 %v838, 4294901760
        %840 = vmatpush1.msra.mxu0 %v839
        %841 = vmatprep.subr.mxu0 0.0
        %v842 = vand.u32 %v325, 4294901760
        %v843 = vsub.f32 %v325, %v842
        %v844 = vand.u32 %v843, 4294901760
        %845 = vmatpush1.msra.mxu0 %v844
        %846 = vmatprep.subr.mxu0 0.0
        %847 = vmatpush1.msra.mxu0 0.0
        %848 = vmatprep.subr.mxu0 0.0
        %849 = vmatpush1.msra.mxu0 0.0
        %850 = vmatprep.subr.mxu0 0.0
        %851 = vmatpush1.msra.mxu0 0.0
        %852 = vmatprep.subr.mxu0 0.0
        %853 = vmatpush1.msra.mxu0 0.0
        %854 = vmatprep.subr.mxu0 0.0
        %855 = vmatpush1.msra.mxu0 0.0
        %856 = vmatprep.subr.mxu0 0.0
        %857 = vmatpush1.msra.mxu0 0.0
        %858 = vmatprep.subr.mxu0 0.0
        %859 = vmatpush1.msra.mxu0 0.0
        %860 = vmatprep.subr.mxu0 0.0
        %861 = vmatpush1.msra.mxu0 0.0
        %862 = vmatprep.subr.mxu0 0.0
        %863 = vmatpush1.msra.mxu0 0.0
        %864 = vmatprep.subr.mxu0 0.0
        %865 = vmatpush1.msra.mxu0 0.0
        %866 = vmatprep.subr.mxu0 0.0
        %867 = vmatpush1.msra.mxu0 0.0
        %868 = vmatprep.subr.mxu0 0.0
        %869 = vmatpush1.msra.mxu0 0.0
        %870 = vmatprep.subr.mxu0 0.0
        %871 = vmatpush1.msra.mxu0 0.0
        %872 = vmatprep.subr.mxu0 0.0
        %873 = vmatpush1.msra.mxu0 0.0
        %874 = vmatprep.subr.mxu0 0.0
        %875 = vmatpush1.msra.mxu0 0.0
        %876 = vmatprep.subr.mxu0 0.0
        %877 = vmatpush1.msra.mxu0 0.0
        %878 = vmatprep.mubr.f32.mxu0 0.0
        %v879 = vand.u32 %v329, 4294901760
        %880 = vmatmul.mubr.f32.gmra.mrb[0].mxu0 %v879
        %v881 = vpop.f32.mrb[0].mxu0
        %v882 = vadd.f32 %v763, %v881
        %v883 = vpop.f32.mrb[0].mxu0
        %884 = vdwg.mxu0
        %885 = vmatprep.subr.mxu0 0.0
        %v886 = vand.u32 %v310, 4294901760
        %887 = vmatpush1.msra.mxu0 %v886
        %888 = vmatprep.subr.mxu0 0.0
        %v889 = vand.u32 %v311, 4294901760
        %890 = vmatpush1.msra.mxu0 %v889
        %891 = vmatprep.subr.mxu0 0.0
        %v892 = vand.u32 %v312, 4294901760
        %893 = vmatpush1.msra.mxu0 %v892
        %894 = vmatprep.subr.mxu0 0.0
        %v895 = vand.u32 %v313, 4294901760
        %896 = vmatpush1.msra.mxu0 %v895
        %897 = vmatprep.subr.mxu0 0.0
        %v898 = vand.u32 %v314, 4294901760
        %899 = vmatpush1.msra.mxu0 %v898
        %900 = vmatprep.subr.mxu0 0.0
        %v901 = vand.u32 %v315, 4294901760
        %902 = vmatpush1.msra.mxu0 %v901
        %903 = vmatprep.subr.mxu0 0.0
        %v904 = vand.u32 %v316, 4294901760
        %905 = vmatpush1.msra.mxu0 %v904
        %906 = vmatprep.subr.mxu0 0.0
        %v907 = vand.u32 %v317, 4294901760
        %908 = vmatpush1.msra.mxu0 %v907
        %909 = vmatprep.subr.mxu0 0.0
        %v910 = vand.u32 %v318, 4294901760
        %911 = vmatpush1.msra.mxu0 %v910
        %912 = vmatprep.subr.mxu0 0.0
        %v913 = vand.u32 %v319, 4294901760
        %914 = vmatpush1.msra.mxu0 %v913
        %915 = vmatprep.subr.mxu0 0.0
        %v916 = vand.u32 %v320, 4294901760
        %917 = vmatpush1.msra.mxu0 %v916
        %918 = vmatprep.subr.mxu0 0.0
        %v919 = vand.u32 %v321, 4294901760
        %920 = vmatpush1.msra.mxu0 %v919
        %921 = vmatprep.subr.mxu0 0.0
        %v922 = vand.u32 %v322, 4294901760
        %923 = vmatpush1.msra.mxu0 %v922
        %924 = vmatprep.subr.mxu0 0.0
        %v925 = vand.u32 %v323, 4294901760
        %926 = vmatpush1.msra.mxu0 %v925
        %927 = vmatprep.subr.mxu0 0.0
        %v928 = vand.u32 %v324, 4294901760
        %929 = vmatpush1.msra.mxu0 %v928
        %930 = vmatprep.subr.mxu0 0.0
        %v931 = vand.u32 %v325, 4294901760
        %932 = vmatpush1.msra.mxu0 %v931
        %933 = vmatprep.subr.mxu0 0.0
        %934 = vmatpush1.msra.mxu0 0.0
        %935 = vmatprep.subr.mxu0 0.0
        %936 = vmatpush1.msra.mxu0 0.0
        %937 = vmatprep.subr.mxu0 0.0
        %938 = vmatpush1.msra.mxu0 0.0
        %939 = vmatprep.subr.mxu0 0.0
        %940 = vmatpush1.msra.mxu0 0.0
        %941 = vmatprep.subr.mxu0 0.0
        %942 = vmatpush1.msra.mxu0 0.0
        %943 = vmatprep.subr.mxu0 0.0
        %944 = vmatpush1.msra.mxu0 0.0
        %945 = vmatprep.subr.mxu0 0.0
        %946 = vmatpush1.msra.mxu0 0.0
        %947 = vmatprep.subr.mxu0 0.0
        %948 = vmatpush1.msra.mxu0 0.0
        %949 = vmatprep.subr.mxu0 0.0
        %950 = vmatpush1.msra.mxu0 0.0
        %951 = vmatprep.subr.mxu0 0.0
        %952 = vmatpush1.msra.mxu0 0.0
        %953 = vmatprep.subr.mxu0 0.0
        %954 = vmatpush1.msra.mxu0 0.0
        %955 = vmatprep.subr.mxu0 0.0
        %956 = vmatpush1.msra.mxu0 0.0
        %957 = vmatprep.subr.mxu0 0.0
        %958 = vmatpush1.msra.mxu0 0.0
        %959 = vmatprep.subr.mxu0 0.0
        %960 = vmatpush1.msra.mxu0 0.0
        %961 = vmatprep.subr.mxu0 0.0
        %962 = vmatpush1.msra.mxu0 0.0
        %963 = vmatprep.subr.mxu0 0.0
        %964 = vmatpush1.msra.mxu0 0.0
        %965 = vmatprep.mubr.f32.mxu0 0.0
        %v966 = vand.u32 %v329, 4294901760
        %967 = vmatmul.mubr.f32.gmra.mrb[0].mxu0 %v966
        %v968 = vpop.f32.mrb[0].mxu0
        %v969 = vadd.f32 %v882, %v968
        %v970 = vpop.f32.mrb[0].mxu0
        %971 = vdwg.mxu0
        %v972 = vld [vmem:[%s253] sm:$0x3]
        %v973 = vld [vmem:[%s261] sm:$0x1]
        %v974 = vsub.f32 %v972, %v969
        %v975 = vand.u32 2147483647, %v974
        %vm976 = vcmask 9216
        %v977 = vsel %vm976, %v975, 0.0
        %978 = vadd.xlane.f32.xlu0 %v977
        %v979 = vpop.xlane.xlu0 %978
        %v980 = vrot.slane %v979, 4
        %v981 = vadd.f32 %v979, %v980
        %v982 = vrot.slane %v981, 2
        %v983 = vadd.f32 %v981, %v982
        %v984 = vrot.slane %v983, 1
        %v985 = vadd.f32 %v983, %v984
        %s986 = vtos %v985
        %v987 = vstv %s986
        %v988 = vadd.f32 %v973, %v987
        %vm989 = vcmask 0
        %990 = vst.msk [vmem:[%s261] sm:$0x1] %vm989, %v988
        %p991 = scmp.lt.s32.totalorder %s22, 1
        %s992 = scalar_select %p991, %s22, 1
        %p993 = scmp.lt.s32.totalorder %s23, 0
        %s994 = scalar_select %p993, %s23, 0
        %s995 = sadd.s32 %s994, %s992
        %s996 = scalar_lea.vmem %s3, %s995
        // Predicated region
        $region41: #{tpu_custom_call.1} parent=31 // pred_check
          %p997 = pneg %p137
        $region42: #{tpu_custom_call.1} parent=31 // pred_check_branch
          %999 = sbr.rel (%p997) target = $region44
        $region43: #{tpu_custom_call.1} parent=31 // pred_region
          _
        $region44: #{tpu_custom_call.1} parent=31 // pred_fallthru
          _
      $region32: #{tpu_custom_call.1} parent=5 // pred_fallthru
        _
      %p1000 = scmp.le.s32.totalorder 2, %s12
      // Predicated region
      $region45: #{tpu_custom_call.1} parent=5 // pred_check
        %p1001 = pneg %p1000
      $region46: #{tpu_custom_call.1} parent=5 // pred_check_branch
        %1003 = sbr.rel (%p1001) target = $region48
      $region47: #{tpu_custom_call.1} parent=5 // pred_region
        %s1004 = ssub.s32 %s12, 2
        // Predicated region
        $region49: #{tpu_custom_call.1} parent=47 // pred_check
          %p1005 = pneg %p143
        $region50: #{tpu_custom_call.1} parent=47 // pred_check_branch
          %1007 = sbr.rel (%p1005) target = $region52
        $region51: #{tpu_custom_call.1} parent=47 // pred_region
          %p1008 = scmp.lt.s32.totalorder %s25, 1
          %s1009 = scalar_select %p1008, %s25, 1
          %p1010 = scmp.lt.s32.totalorder %s26, 0
          %s1011 = scalar_select %p1010, %s26, 0
          %s1012 = sadd.s32 %s1011, %s1009
          %s1013 = scalar_lea.vmem %s3, %s1012
        $region52: #{tpu_custom_call.1} parent=47 // pred_fallthru
          _
      $region48: #{tpu_custom_call.1} parent=5 // pred_fallthru
        _
    $region6: #{tpu_custom_call.1} parent=1 // loop_footer
      %s16 = sadd.s32 1, %s12
    $region7: #{tpu_custom_call.1} parent=1 // loop_footer_branch
      %11 = sbr.rel target = $region3
    $region8: #{tpu_custom_call.1} parent=1 // loop_exit
      _
    %1014 = vsyncpa [#allocation3], 1
    %s1015 = scalar_lea.sflag [#allocation3], 1
    %1016 = vsyncpa %s1015, 1

</llo_original>
